<compile_context>
chip_gen: v7x
topology: tpu7x:2x2x1
jax: 0.10.0
libtpu: 0.0.40
codegen_flags: <defaults>
</compile_context>

<pallas_src>
import jax
import jax.numpy as jnp
from jax.experimental import pallas as pl
from jax.experimental.pallas import tpu as pltpu

LANES = 128
MAX_TILE_R = 1024   # 1024x128 f32 tile = 512 KiB; 3 f32 + 1 i8 streams,
                    # double-buffered ~3.3 MiB VMEM -> fits every generation.
NUM_CORES = 2       # "parallel" leading grid axis: 2 TCs on v7x, no-op on v5e/v6e.


def _round_up(x, m):
    return (x + m - 1) // m * m


def _build_kernel(block_rows, rows, total_blocks, bpc, has_dup, needs_tail):
    """Kernel closure over static tiling parameters."""
    groups = block_rows // 8

    def fold(x):
        # (block_rows, 128) -> (8, 128) partial sums. The reshape splits the
        # sublane axis on (8,128)-tile boundaries, so the reduction is plain
        # VPU adds (no per-step cross-lane/scalar reduction).
        return jnp.sum(x.reshape(groups, 8, LANES), axis=0)

    def kernel(vp_ref, vr_ref, xi_ref, m_ref, out_ref):
        c = pl.program_id(0)   # core split (parallel)
        i = pl.program_id(1)   # streaming/reduction axis (arbitrary)

        @pl.when(i == 0)
        def _init():
            out_ref[...] = jnp.zeros_like(out_ref)

        def accumulate():
            sel = m_ref[...] != 0                      # int8 mask -> bool (free VPU)
            if needs_tail:
                # Mask off the Pallas-implicit boundary rows (garbage data).
                blk = c * (total_blocks - 1) + (1 - 2 * c) * i
                row = blk * block_rows + jax.lax.broadcasted_iota(
                    jnp.int32, (block_rows, LANES), 0)
                sel = jnp.logical_and(sel, row < rows)

            # Zero unselected inputs once: every derived term is then already
            # masked (and garbage rows can never inject NaN/Inf into the sums).
            vp = jnp.where(sel, vp_ref[...], 0.0)
            vr = jnp.where(sel, vr_ref[...], 0.0)
            xi = jnp.where(sel, xi_ref[...], 0.0)

            et = vr - vp
            ei = xi - vp
            et2 = et * et
            ratio = jnp.abs(et) / (jnp.abs(ei) + 1e-18)   # exact divide (numerics)
            weighted = et2 * ratio
            cnt = sel.astype(jnp.float32)

            out_ref[0, 0] += fold(et2)       # sum(mask * error_target**2)
            out_ref[0, 1] += fold(ratio)     # sum(mask * |et| / (|ei|+eps))
            out_ref[0, 2] += fold(weighted)  # sum(mask * et^2 * |et|/(|ei|+eps))
            out_ref[0, 3] += fold(cnt)       # sum(mask)

        if has_dup:
            # Odd block count: core 1's last step would repeat core 0's last
            # block (index_map keeps it in-range); skip it to avoid double count.
            @pl.when(jnp.logical_or(c == 0, i < bpc - 1))
            def _():
                accumulate()
        else:
            accumulate()

    return kernel


@jax.jit
def _masked_sums(v_pred, v_real, inp, mask):
    """Returns (4,) f32: [sum et^2, sum ratio, sum weighted, count] over mask."""
    n = v_pred.size
    n_pad = _round_up(n, LANES)
    rows = n_pad // LANES

    # Block sizing: full-extent block when small & aligned (zero overhead),
    # otherwise up to MAX_TILE_R rows (multiple of 32 for the int8 mask tiles).
    if rows <= MAX_TILE_R and rows % 8 == 0:
        block_rows = rows
    else:
        block_rows = min(MAX_TILE_R, _round_up(rows, 32))

    total_blocks = pl.cdiv(rows, block_rows)
    bpc = pl.cdiv(total_blocks, NUM_CORES)          # inner grid extent per core
    has_dup = (total_blocks % NUM_CORES) != 0
    needs_tail = (block_rows * total_blocks) != rows

    def prep(x, dtype):
        flat = jnp.ravel(x).astype(dtype)
        if n_pad != n:                               # only when lane-unaligned
            flat = jnp.pad(flat, (0, n_pad - n))
        return flat.reshape(rows, LANES)

    vp = prep(v_pred, jnp.float32)
    vr = prep(v_real, jnp.float32)
    xi = prep(inp, jnp.float32)
    mk = prep(mask, jnp.int8)                        # 1 B/elem mask stream

    def in_idx(c, i):
        # core 0 walks blocks ascending from 0, core 1 descending from the end:
        # every referenced block index is in range (no fully-OOB DMA).
        return (c * (total_blocks - 1) + (1 - 2 * c) * i, 0)

    data_spec = pl.BlockSpec((block_rows, LANES), in_idx)

    partials = pl.pallas_call(
        _build_kernel(block_rows, rows, total_blocks, bpc, has_dup, needs_tail),
        out_shape=jax.ShapeDtypeStruct((NUM_CORES, 4, 8, LANES), jnp.float32),
        grid_spec=pltpu.PrefetchScalarGridSpec(
            num_scalar_prefetch=0,
            grid=(NUM_CORES, bpc),
            in_specs=[data_spec, data_spec, data_spec, data_spec],
            out_specs=pl.BlockSpec((1, 4, 8, LANES), lambda c, i: (c, 0, 0, 0)),
        ),
        compiler_params=pltpu.CompilerParams(
            dimension_semantics=("parallel", "arbitrary")),
    )(vp, vr, xi, mk)

    # Tiny final cross-lane reduce outside the kernel: (2, 4, 8, 128) -> (4,).
    return jnp.sum(partials, axis=(0, 2, 3))


def step_forward_loss(v_pred, v_real, inp, mask):
    """JAX/Pallas equivalent of StepForwardLoss.forward (incl. debug prints)."""
    sums = _masked_sums(v_pred, v_real, inp, mask)
    count = sums[3]                      # NOTE: count==0 -> NaN, like torch's empty mean
    mse_mean = sums[0] / count
    ratio_mean = sums[1] / count
    error = sums[2] / count
    # Replicate the module's debug prints (host-side, concrete values).
    # TODO(synk): use jax.debug.print if this wrapper is ever run under jax.jit.
    print(mse_mean)
    print(ratio_mean)
    print()
    return error


def _reference(v_pred, v_real, inp, mask):
    """Pure-JAX reference (masked-mean formulation)."""
    m = mask.astype(jnp.float32)
    vp = v_pred.astype(jnp.float32)
    et = v_real.astype(jnp.float32) - vp
    ei = inp.astype(jnp.float32) - vp
    w = et * et * (jnp.abs(et) / (jnp.abs(ei) + 1e-18))
    return jnp.sum(w * m) / jnp.sum(m)


if __name__ == "__main__":
    key = jax.random.PRNGKey(0)

    def make_case(k, shape):
        k1, k2, k3, k4 = jax.random.split(k, 4)
        v_pred = jax.random.normal(k1, shape, dtype=jnp.float32)
        v_real = jax.random.normal(k2, shape, dtype=jnp.float32)
        inp = jax.random.normal(k3, shape, dtype=jnp.float32)
        mask = jax.random.bernoulli(k4, p=0.5, shape=shape)
        return v_pred, v_real, inp, mask

    shapes = [
        (2, 4, 16, 16),      # single aligned block (block == full extent)
        (2, 8, 128, 128),    # 2048 rows -> two 1024-row blocks, one per core
        (3, 5, 7, 11),       # ragged: lane padding + partial boundary block
    ]
    for k, shape in zip(jax.random.split(key, len(shapes)), shapes):
        args = make_case(k, shape)
        out = jax.block_until_ready(step_forward_loss(*args))
        ref = jax.block_until_ready(_reference(*args))
        assert jnp.allclose(out, ref, rtol=1e-4, atol=1e-6), (shape, out, ref)

    print("KERNEL_OK")
</pallas_src>

<mosaic_0001>
module attributes {stable_mosaic.version = 11 : i64} {
  func.func @kernel(%arg0: i32, %arg1: i32, %arg2: memref<16x128xf32, #tpu.memory_space<vmem>>, %arg3: memref<16x128xf32, #tpu.memory_space<vmem>>, %arg4: memref<16x128xf32, #tpu.memory_space<vmem>>, %arg5: memref<16x128xi8, #tpu.memory_space<vmem>>, %arg6: memref<1x4x8x128xf32, #tpu.memory_space<vmem>>) attributes {dimension_semantics = [#tpu.dimension_semantics<parallel>, #tpu.dimension_semantics<arbitrary>], iteration_bounds = array<i64: 2, 1>, scalar_prefetch = 0 : i64, scratch_operands = 0 : i64, tpu.core_type = #tpu.core_type<tc>, window_params = [{transform_indices = @transform_0, window_bounds = array<i64: 16, 128>}, {transform_indices = @transform_1, window_bounds = array<i64: 16, 128>}, {transform_indices = @transform_2, window_bounds = array<i64: 16, 128>}, {transform_indices = @transform_3, window_bounds = array<i64: 16, 128>}, {transform_indices = @transform_4, window_bounds = array<i64: 1, 4, 8, 128>}]} {
    %c0_i32 = arith.constant 0 : i32
    %0 = arith.cmpi eq, %arg1, %c0_i32 : i32
    %1 = arith.extui %0 : i1 to i32
    %c0_i32_0 = arith.constant 0 : i32
    %2 = arith.cmpi ne, %1, %c0_i32_0 : i32
    scf.if %2 {
      %cst = arith.constant 0.000000e+00 : f32
      %8 = vector.broadcast %cst : f32 to vector<1x4x8x128xf32>
      %c0 = arith.constant 0 : index
      %c0_4 = arith.constant 0 : index
      %c0_5 = arith.constant 0 : index
      %c0_6 = arith.constant 0 : index
      %9 = vector.load %arg6[%c0, %c0_4, %c0_5, %c0_6] : memref<1x4x8x128xf32, #tpu.memory_space<vmem>>, vector<1x4x8x128xf32>
      tpu.vector_store %arg6[%c0, %c0_4, %c0_5, %c0_6], %8 {strides = array<i32>} : memref<1x4x8x128xf32, #tpu.memory_space<vmem>>, vector<1x4x8x128xf32>,
    } else {
    }
    %c0_i32_1 = arith.constant 0 : i32
    %3 = arith.cmpi eq, %arg0, %c0_i32_1 : i32
    %c0_i32_2 = arith.constant 0 : i32
    %4 = arith.cmpi slt, %arg1, %c0_i32_2 : i32
    %5 = arith.ori %3, %4 : i1
    %6 = arith.extui %5 : i1 to i32
    %c0_i32_3 = arith.constant 0 : i32
    %7 = arith.cmpi ne, %6, %c0_i32_3 : i32
    scf.if %7 {
      %c0 = arith.constant 0 : index
      %c0_4 = arith.constant 0 : index
      %8 = vector.load %arg5[%c0, %c0_4] : memref<16x128xi8, #tpu.memory_space<vmem>>, vector<16x128xi8>
      %c0_i8 = arith.constant 0 : i8
      %9 = vector.broadcast %c0_i8 : i8 to vector<16x128xi8>
      %10 = arith.cmpi ne, %8, %9 : vector<16x128xi8>
      %c0_5 = arith.constant 0 : index
      %c0_6 = arith.constant 0 : index
      %11 = vector.load %arg2[%c0_5, %c0_6] : memref<16x128xf32, #tpu.memory_space<vmem>>, vector<16x128xf32>
      %cst = arith.constant 0.000000e+00 : f32
      %12 = vector.broadcast %cst : f32 to vector<16x128xf32>
      %13 = arith.select %10, %11, %12 : vector<16x128xi1>, vector<16x128xf32>
      %c0_7 = arith.constant 0 : index
      %c0_8 = arith.constant 0 : index
      %14 = vector.load %arg3[%c0_7, %c0_8] : memref<16x128xf32, #tpu.memory_space<vmem>>, vector<16x128xf32>
      %cst_9 = arith.constant 0.000000e+00 : f32
      %15 = vector.broadcast %cst_9 : f32 to vector<16x128xf32>
      %16 = arith.select %10, %14, %15 : vector<16x128xi1>, vector<16x128xf32>
      %c0_10 = arith.constant 0 : index
      %c0_11 = arith.constant 0 : index
      %17 = vector.load %arg4[%c0_10, %c0_11] : memref<16x128xf32, #tpu.memory_space<vmem>>, vector<16x128xf32>
      %cst_12 = arith.constant 0.000000e+00 : f32
      %18 = vector.broadcast %cst_12 : f32 to vector<16x128xf32>
      %19 = arith.select %10, %17, %18 : vector<16x128xi1>, vector<16x128xf32>
      %20 = arith.subf %16, %13 : vector<16x128xf32>
      %21 = arith.subf %19, %13 : vector<16x128xf32>
      %22 = arith.mulf %20, %20 : vector<16x128xf32>
      %23 = math.absf %20 : vector<16x128xf32>
      %24 = math.absf %21 : vector<16x128xf32>
      %cst_13 = arith.constant 1.000000e-18 : f32
      %25 = vector.broadcast %cst_13 : f32 to vector<16x128xf32>
      %26 = arith.addf %24, %25 : vector<16x128xf32>
      %27 = arith.divf %23, %26 : vector<16x128xf32>
      %28 = arith.mulf %22, %27 : vector<16x128xf32>
      %29 = arith.extui %10 : vector<16x128xi1> to vector<16x128xi32>
      %30 = arith.sitofp %29 : vector<16x128xi32> to vector<16x128xf32>
      %c0_14 = arith.constant 0 : index
      %c0_15 = arith.constant 0 : index
      %c0_16 = arith.constant 0 : index
      %c0_17 = arith.constant 0 : index
      %31 = vector.load %arg6[%c0_14, %c0_15, %c0_16, %c0_17] : memref<1x4x8x128xf32, #tpu.memory_space<vmem>>, vector<1x1x8x128xf32>
      %32 = vector.shape_cast %31 : vector<1x1x8x128xf32> to vector<8x128xf32>
      %33 = vector.shape_cast %22 : vector<16x128xf32> to vector<2x8x128xf32>
      %cst_18 = arith.constant dense<0.000000e+00> : vector<8x128xf32>
      %34 = vector.multi_reduction <add>, %33, %cst_18 [0] : vector<2x8x128xf32> to vector<8x128xf32>
      %35 = arith.addf %32, %34 : vector<8x128xf32>
      %c0_19 = arith.constant 0 : index
      %c0_20 = arith.constant 0 : index
      %c0_21 = arith.constant 0 : index
      %c0_22 = arith.constant 0 : index
      %36 = vector.load %arg6[%c0_19, %c0_20, %c0_21, %c0_22] : memref<1x4x8x128xf32, #tpu.memory_space<vmem>>, vector<1x1x8x128xf32>
      %37 = vector.shape_cast %36 : vector<1x1x8x128xf32> to vector<8x128xf32>
      %38 = vector.shape_cast %35 : vector<8x128xf32> to vector<1x1x8x128xf32>
      tpu.vector_store %arg6[%c0_19, %c0_20, %c0_21, %c0_22], %38 {strides = array<i32>} : memref<1x4x8x128xf32, #tpu.memory_space<vmem>>, vector<1x1x8x128xf32>,
      %c0_23 = arith.constant 0 : index
      %c1 = arith.constant 1 : index
      %c0_24 = arith.constant 0 : index
      %c0_25 = arith.constant 0 : index
      %39 = vector.load %arg6[%c0_23, %c1, %c0_24, %c0_25] : memref<1x4x8x128xf32, #tpu.memory_space<vmem>>, vector<1x1x8x128xf32>
      %40 = vector.shape_cast %39 : vector<1x1x8x128xf32> to vector<8x128xf32>
      %41 = vector.shape_cast %27 : vector<16x128xf32> to vector<2x8x128xf32>
      %cst_26 = arith.constant dense<0.000000e+00> : vector<8x128xf32>
      %42 = vector.multi_reduction <add>, %41, %cst_26 [0] : vector<2x8x128xf32> to vector<8x128xf32>
      %43 = arith.addf %40, %42 : vector<8x128xf32>
      %c0_27 = arith.constant 0 : index
      %c1_28 = arith.constant 1 : index
      %c0_29 = arith.constant 0 : index
      %c0_30 = arith.constant 0 : index
      %44 = vector.load %arg6[%c0_27, %c1_28, %c0_29, %c0_30] : memref<1x4x8x128xf32, #tpu.memory_space<vmem>>, vector<1x1x8x128xf32>
      %45 = vector.shape_cast %44 : vector<1x1x8x128xf32> to vector<8x128xf32>
      %46 = vector.shape_cast %43 : vector<8x128xf32> to vector<1x1x8x128xf32>
      tpu.vector_store %arg6[%c0_27, %c1_28, %c0_29, %c0_30], %46 {strides = array<i32>} : memref<1x4x8x128xf32, #tpu.memory_space<vmem>>, vector<1x1x8x128xf32>,
      %c0_31 = arith.constant 0 : index
      %c2 = arith.constant 2 : index
      %c0_32 = arith.constant 0 : index
      %c0_33 = arith.constant 0 : index
      %47 = vector.load %arg6[%c0_31, %c2, %c0_32, %c0_33] : memref<1x4x8x128xf32, #tpu.memory_space<vmem>>, vector<1x1x8x128xf32>
      %48 = vector.shape_cast %47 : vector<1x1x8x128xf32> to vector<8x128xf32>
      %49 = vector.shape_cast %28 : vector<16x128xf32> to vector<2x8x128xf32>
      %cst_34 = arith.constant dense<0.000000e+00> : vector<8x128xf32>
      %50 = vector.multi_reduction <add>, %49, %cst_34 [0] : vector<2x8x128xf32> to vector<8x128xf32>
      %51 = arith.addf %48, %50 : vector<8x128xf32>
      %c0_35 = arith.constant 0 : index
      %c2_36 = arith.constant 2 : index
      %c0_37 = arith.constant 0 : index
      %c0_38 = arith.constant 0 : index
      %52 = vector.load %arg6[%c0_35, %c2_36, %c0_37, %c0_38] : memref<1x4x8x128xf32, #tpu.memory_space<vmem>>, vector<1x1x8x128xf32>
      %53 = vector.shape_cast %52 : vector<1x1x8x128xf32> to vector<8x128xf32>
      %54 = vector.shape_cast %51 : vector<8x128xf32> to vector<1x1x8x128xf32>
      tpu.vector_store %arg6[%c0_35, %c2_36, %c0_37, %c0_38], %54 {strides = array<i32>} : memref<1x4x8x128xf32, #tpu.memory_space<vmem>>, vector<1x1x8x128xf32>,
      %c0_39 = arith.constant 0 : index
      %c3 = arith.constant 3 : index
      %c0_40 = arith.constant 0 : index
      %c0_41 = arith.constant 0 : index
      %55 = vector.load %arg6[%c0_39, %c3, %c0_40, %c0_41] : memref<1x4x8x128xf32, #tpu.memory_space<vmem>>, vector<1x1x8x128xf32>
      %56 = vector.shape_cast %55 : vector<1x1x8x128xf32> to vector<8x128xf32>
      %57 = vector.shape_cast %30 : vector<16x128xf32> to vector<2x8x128xf32>
      %cst_42 = arith.constant dense<0.000000e+00> : vector<8x128xf32>
      %58 = vector.multi_reduction <add>, %57, %cst_42 [0] : vector<2x8x128xf32> to vector<8x128xf32>
      %59 = arith.addf %56, %58 : vector<8x128xf32>
      %c0_43 = arith.constant 0 : index
      %c3_44 = arith.constant 3 : index
      %c0_45 = arith.constant 0 : index
      %c0_46 = arith.constant 0 : index
      %60 = vector.load %arg6[%c0_43, %c3_44, %c0_45, %c0_46] : memref<1x4x8x128xf32, #tpu.memory_space<vmem>>, vector<1x1x8x128xf32>
      %61 = vector.shape_cast %60 : vector<1x1x8x128xf32> to vector<8x128xf32>
      %62 = vector.shape_cast %59 : vector<8x128xf32> to vector<1x1x8x128xf32>
      tpu.vector_store %arg6[%c0_43, %c3_44, %c0_45, %c0_46], %62 {strides = array<i32>} : memref<1x4x8x128xf32, #tpu.memory_space<vmem>>, vector<1x1x8x128xf32>,
    } else {
    }
    return
  }
  func.func @transform_0(%arg0: i32, %arg1: i32) -> (i32, i32) {
    %c0_i32 = arith.constant 0 : i32
    %0 = arith.muli %arg0, %c0_i32 : i32
    %c2_i32 = arith.constant 2 : i32
    %1 = arith.muli %c2_i32, %arg0 : i32
    %c1_i32 = arith.constant 1 : i32
    %2 = arith.subi %c1_i32, %1 : i32
    %3 = arith.muli %2, %arg1 : i32
    %4 = arith.addi %0, %3 : i32
    %c0_i32_0 = arith.constant 0 : i32
    %c0_i32_1 = arith.constant 0 : i32
    return %4, %c0_i32_0 : i32, i32
  }
  func.func @transform_1(%arg0: i32, %arg1: i32) -> (i32, i32) {
    %c0_i32 = arith.constant 0 : i32
    %0 = arith.muli %arg0, %c0_i32 : i32
    %c2_i32 = arith.constant 2 : i32
    %1 = arith.muli %c2_i32, %arg0 : i32
    %c1_i32 = arith.constant 1 : i32
    %2 = arith.subi %c1_i32, %1 : i32
    %3 = arith.muli %2, %arg1 : i32
    %4 = arith.addi %0, %3 : i32
    %c0_i32_0 = arith.constant 0 : i32
    %c0_i32_1 = arith.constant 0 : i32
    return %4, %c0_i32_0 : i32, i32
  }
  func.func @transform_2(%arg0: i32, %arg1: i32) -> (i32, i32) {
    %c0_i32 = arith.constant 0 : i32
    %0 = arith.muli %arg0, %c0_i32 : i32
    %c2_i32 = arith.constant 2 : i32
    %1 = arith.muli %c2_i32, %arg0 : i32
    %c1_i32 = arith.constant 1 : i32
    %2 = arith.subi %c1_i32, %1 : i32
    %3 = arith.muli %2, %arg1 : i32
    %4 = arith.addi %0, %3 : i32
    %c0_i32_0 = arith.constant 0 : i32
    %c0_i32_1 = arith.constant 0 : i32
    return %4, %c0_i32_0 : i32, i32
  }
  func.func @transform_3(%arg0: i32, %arg1: i32) -> (i32, i32) {
    %c0_i32 = arith.constant 0 : i32
    %0 = arith.muli %arg0, %c0_i32 : i32
    %c2_i32 = arith.constant 2 : i32
    %1 = arith.muli %c2_i32, %arg0 : i32
    %c1_i32 = arith.constant 1 : i32
    %2 = arith.subi %c1_i32, %1 : i32
    %3 = arith.muli %2, %arg1 : i32
    %4 = arith.addi %0, %3 : i32
    %c0_i32_0 = arith.constant 0 : i32
    %c0_i32_1 = arith.constant 0 : i32
    return %4, %c0_i32_0 : i32, i32
  }
  func.func @transform_4(%arg0: i32, %arg1: i32) -> (i32, i32, i32, i32) {
    %c0_i32 = arith.constant 0 : i32
    %c0_i32_0 = arith.constant 0 : i32
    %c0_i32_1 = arith.constant 0 : i32
    %c0_i32_2 = arith.constant 0 : i32
    return %arg0, %c0_i32, %c0_i32_0, %c0_i32_1 : i32, i32, i32, i32
  }
}

</mosaic_0001>

<llo_original>
// kernel: _masked_sums.1
$region0: #{_masked_sums.1}
  #allocation0 [shape = 'u32[]', space=smem, size = 0x4, offset = 0x4, fixed_abs, tag = 'smem constant byte address 0x4 - core index']
  #allocation1 [shape = 'u32[144,128]{1,0:T(1,128)}', space=vmem, size = 0x12000, scoped, tag = 'internal scratch']
  %s0 = inlined_call_operand.vmem [shape: f32[16,128], index: 0, kind: input, shape index: {}]
  %s1 = inlined_call_operand.vmem [shape: f32[16,128], index: 1, kind: input, shape index: {}]
  %s2 = inlined_call_operand.vmem [shape: f32[16,128], index: 2, kind: input, shape index: {}]
  %s3 = inlined_call_operand.vmem [shape: s8[16,128], index: 3, kind: input, shape index: {}]
  %s4 = inlined_call_operand.vmem [shape: f32[2,4,8,128], index: 4, kind: output, shape index: {}]
  %s5 = sld [smem:[#allocation0]]
  $region57: #{_masked_sums.1} parent=0
    _
  %s7 = ssub.s32 1, %s5
  %s8 = scalar_select 0, %s7, %s5
  loop: start=0, step=1, limit=4
  $region2: #{_masked_sums.1} parent=0 // loop_pre_header
    _
  $region3: #{_masked_sums.1} parent=0 // loop_header
    %s10 = sphi 0, %s14
    %p11 = scmp.ge.s32.totalorder %s10, 4
    %s17 = sphi 0, %s29
    %s18 = sphi 0, %s25
    %s19 = sphi 0, %s17
    %s20 = sphi 0, %s18
    %s21 = sphi 0, %s19
    %s22 = sphi 0, %s20
    %s38 = sphi 0, %s40
    %s41 = sphi 0, %s38
    %s42 = sphi 0, %s41
    %s58 = sphi 0, %s42
    %s70 = sphi 0, %s72
    %s73 = sphi 0, %s70
    %s74 = sphi 0, %s73
    %s90 = sphi 0, %s74
    %s102 = sphi 0, %s104
    %s105 = sphi 0, %s102
    %s106 = sphi 0, %s105
    %s122 = sphi 0, %s106
    %s134 = sphi 0, %s136
    %s137 = sphi 0, %s134
    %s138 = sphi 0, %s137
    %s154 = sphi 0, %s138
    %s160 = sphi 0, %s162
    %s163 = sphi 0, %s160
    %s164 = sphi 0, %s163
    %s180 = sphi 0, %s164
  $region4: #{_masked_sums.1} parent=0 // loop_header_branch
    %13 = sbr.rel (%p11) target = $region8
  $region5: #{_masked_sums.1} parent=0 // loop_body
    %s15 = ssub.s32 %s10, 1
    %s16 = ssub.s32 %s10, 2
    %s23 = sadd.s32 1, %s18
    %p24 = scmp.ge.s32.totalorder %s23, 1
    %s25 = scalar_select %p24, 0, %s23
    %s26 = sadd.s32 1, %s17
    %s27 = scalar_select %p24, %s26, %s17
    %p28 = scmp.ge.s32.totalorder %s27, 2
    %s29 = scalar_select %p28, 0, %s27
    %s30 = smul.u32 %s17, 2
    %s31 = ssub.s32 1, %s30
    %s32 = smul.u32 %s31, %s18
    %s33 = smul.u32 %s29, 2
    %s34 = ssub.s32 1, %s33
    %s35 = smul.u32 %s34, %s25
    %s36 = ssub.s32 %s32, %s35
    %p37 = scmp.eq.s32.totalorder %s36, 0
    %s39 = sadd.s32 %s38, 1
    %s40 = scalar_select %p37, %s38, %s39
    %p43 = pneg %p37
    %p44 = scmp.eq.s32.totalorder %s10, 1
    %p45 = por %p43, %p44
    %p46 = scmp.ne.s32.totalorder %s38, %s41
    %p47 = scmp.eq.s32.totalorder %s10, 0
    %p48 = por %p46, %p47
    %p49 = scmp.ne.s32.totalorder %s38, %s41
    %p50 = scmp.eq.s32.totalorder %s15, 1
    %p51 = por %p49, %p50
    %p52 = scmp.ne.s32.totalorder %s41, %s42
    %p53 = scmp.eq.s32.totalorder %s15, 0
    %p54 = por %p52, %p53
    %p55 = scmp.ne.s32.totalorder %s41, %s42
    %p56 = scmp.eq.s32.totalorder %s16, 1
    %p57 = por %p55, %p56
    %p59 = scmp.ne.s32.totalorder %s42, %s58
    %p60 = scmp.eq.s32.totalorder %s16, 0
    %p61 = por %p59, %p60
    %s62 = smul.u32 %s17, 2
    %s63 = ssub.s32 1, %s62
    %s64 = smul.u32 %s63, %s18
    %s65 = smul.u32 %s29, 2
    %s66 = ssub.s32 1, %s65
    %s67 = smul.u32 %s66, %s25
    %s68 = ssub.s32 %s64, %s67
    %p69 = scmp.eq.s32.totalorder %s68, 0
    %s71 = sadd.s32 %s70, 1
    %s72 = scalar_select %p69, %s70, %s71
    %p75 = pneg %p69
    %p76 = scmp.eq.s32.totalorder %s10, 1
    %p77 = por %p75, %p76
    %p78 = scmp.ne.s32.totalorder %s70, %s73
    %p79 = scmp.eq.s32.totalorder %s10, 0
    %p80 = por %p78, %p79
    %p81 = scmp.ne.s32.totalorder %s70, %s73
    %p82 = scmp.eq.s32.totalorder %s15, 1
    %p83 = por %p81, %p82
    %p84 = scmp.ne.s32.totalorder %s73, %s74
    %p85 = scmp.eq.s32.totalorder %s15, 0
    %p86 = por %p84, %p85
    %p87 = scmp.ne.s32.totalorder %s73, %s74
    %p88 = scmp.eq.s32.totalorder %s16, 1
    %p89 = por %p87, %p88
    %p91 = scmp.ne.s32.totalorder %s74, %s90
    %p92 = scmp.eq.s32.totalorder %s16, 0
    %p93 = por %p91, %p92
    %s94 = smul.u32 %s17, 2
    %s95 = ssub.s32 1, %s94
    %s96 = smul.u32 %s95, %s18
    %s97 = smul.u32 %s29, 2
    %s98 = ssub.s32 1, %s97
    %s99 = smul.u32 %s98, %s25
    %s100 = ssub.s32 %s96, %s99
    %p101 = scmp.eq.s32.totalorder %s100, 0
    %s103 = sadd.s32 %s102, 1
    %s104 = scalar_select %p101, %s102, %s103
    %p107 = pneg %p101
    %p108 = scmp.eq.s32.totalorder %s10, 1
    %p109 = por %p107, %p108
    %p110 = scmp.ne.s32.totalorder %s102, %s105
    %p111 = scmp.eq.s32.totalorder %s10, 0
    %p112 = por %p110, %p111
    %p113 = scmp.ne.s32.totalorder %s102, %s105
    %p114 = scmp.eq.s32.totalorder %s15, 1
    %p115 = por %p113, %p114
    %p116 = scmp.ne.s32.totalorder %s105, %s106
    %p117 = scmp.eq.s32.totalorder %s15, 0
    %p118 = por %p116, %p117
    %p119 = scmp.ne.s32.totalorder %s105, %s106
    %p120 = scmp.eq.s32.totalorder %s16, 1
    %p121 = por %p119, %p120
    %p123 = scmp.ne.s32.totalorder %s106, %s122
    %p124 = scmp.eq.s32.totalorder %s16, 0
    %p125 = por %p123, %p124
    %s126 = smul.u32 %s17, 2
    %s127 = ssub.s32 1, %s126
    %s128 = smul.u32 %s127, %s18
    %s129 = smul.u32 %s29, 2
    %s130 = ssub.s32 1, %s129
    %s131 = smul.u32 %s130, %s25
    %s132 = ssub.s32 %s128, %s131
    %p133 = scmp.eq.s32.totalorder %s132, 0
    %s135 = sadd.s32 %s134, 1
    %s136 = scalar_select %p133, %s134, %s135
    %p139 = pneg %p133
    %p140 = scmp.eq.s32.totalorder %s10, 1
    %p141 = por %p139, %p140
    %p142 = scmp.ne.s32.totalorder %s134, %s137
    %p143 = scmp.eq.s32.totalorder %s10, 0
    %p144 = por %p142, %p143
    %p145 = scmp.ne.s32.totalorder %s134, %s137
    %p146 = scmp.eq.s32.totalorder %s15, 1
    %p147 = por %p145, %p146
    %p148 = scmp.ne.s32.totalorder %s137, %s138
    %p149 = scmp.eq.s32.totalorder %s15, 0
    %p150 = por %p148, %p149
    %p151 = scmp.ne.s32.totalorder %s137, %s138
    %p152 = scmp.eq.s32.totalorder %s16, 1
    %p153 = por %p151, %p152
    %p155 = scmp.ne.s32.totalorder %s138, %s154
    %p156 = scmp.eq.s32.totalorder %s16, 0
    %p157 = por %p155, %p156
    %s158 = ssub.s32 %s17, %s29
    %p159 = scmp.eq.s32.totalorder %s158, 0
    %s161 = sadd.s32 %s160, 1
    %s162 = scalar_select %p159, %s160, %s161
    %p165 = pneg %p159
    %p166 = scmp.eq.s32.totalorder %s10, 1
    %p167 = por %p165, %p166
    %p168 = scmp.ne.s32.totalorder %s160, %s163
    %p169 = scmp.eq.s32.totalorder %s10, 0
    %p170 = por %p168, %p169
    %p171 = scmp.ne.s32.totalorder %s160, %s163
    %p172 = scmp.eq.s32.totalorder %s15, 1
    %p173 = por %p171, %p172
    %p174 = scmp.ne.s32.totalorder %s163, %s164
    %p175 = scmp.eq.s32.totalorder %s15, 0
    %p176 = por %p174, %p175
    %p177 = scmp.ne.s32.totalorder %s163, %s164
    %p178 = scmp.eq.s32.totalorder %s16, 1
    %p179 = por %p177, %p178
    %p181 = scmp.ne.s32.totalorder %s164, %s180
    %p182 = scmp.eq.s32.totalorder %s16, 0
    %p183 = por %p181, %p182
    %p184 = scmp.le.s32.totalorder 1, %s10
    %p185 = scmp.lt.s32.totalorder %s10, 3
    %p186 = pnand %p184, %p185
    %p187 = pneg %p186
    // Predicated region
    $region9: #{_masked_sums.1} parent=5 // pred_check
      _
    $region10: #{_masked_sums.1} parent=5 // pred_check_branch
      %189 = sbr.rel (%p186) target = $region12
    $region11: #{_masked_sums.1} parent=5 // pred_region
      %s190 = ssub.s32 %s10, 1
    $region12: #{_masked_sums.1} parent=5 // pred_fallthru
      _
    %p191 = scmp.lt.s32.totalorder %s10, 2
    // Predicated region
    $region13: #{_masked_sums.1} parent=5 // pred_check
      %p192 = pneg %p191
    $region14: #{_masked_sums.1} parent=5 // pred_check_branch
      %194 = sbr.rel (%p192) target = $region16
    $region15: #{_masked_sums.1} parent=5 // pred_region
      // Predicated region
      $region17: #{_masked_sums.1} parent=15 // pred_check
        %p195 = pneg %p48
      $region18: #{_masked_sums.1} parent=15 // pred_check_branch
        %197 = sbr.rel (%p195) target = $region20
      $region19: #{_masked_sums.1} parent=15 // pred_region
        %s198 = smul.u32 %s17, 2
        %s199 = ssub.s32 1, %s198
        %s200 = smul.u32 %s199, %s18
        %s201 = smul.u32 2, %s200
        %p202 = scmp.lt.s32.totalorder %s201, 1
        %s203 = scalar_select %p202, %s201, 1
        %s204 = smul.addr %s203, 8
        %s205 = scalar_lea.vmem %s0, %s204
        %s206 = smul.u32 %s17, 2
        %s207 = ssub.s32 1, %s206
        %s208 = smul.u32 %s207, %s18
        %s209 = smul.u32 2, %s208
      $region20: #{_masked_sums.1} parent=15 // pred_fallthru
        _
      // Predicated region
      $region21: #{_masked_sums.1} parent=15 // pred_check
        %p210 = pneg %p80
      $region22: #{_masked_sums.1} parent=15 // pred_check_branch
        %212 = sbr.rel (%p210) target = $region24
      $region23: #{_masked_sums.1} parent=15 // pred_region
        %s213 = smul.u32 %s17, 2
        %s214 = ssub.s32 1, %s213
        %s215 = smul.u32 %s214, %s18
        %s216 = smul.u32 2, %s215
        %p217 = scmp.lt.s32.totalorder %s216, 1
        %s218 = scalar_select %p217, %s216, 1
        %s219 = smul.addr %s218, 8
        %s220 = scalar_lea.vmem %s1, %s219
        %s221 = smul.u32 %s17, 2
        %s222 = ssub.s32 1, %s221
        %s223 = smul.u32 %s222, %s18
        %s224 = smul.u32 2, %s223
      $region24: #{_masked_sums.1} parent=15 // pred_fallthru
        _
      // Predicated region
      $region25: #{_masked_sums.1} parent=15 // pred_check
        %p225 = pneg %p112
      $region26: #{_masked_sums.1} parent=15 // pred_check_branch
        %227 = sbr.rel (%p225) target = $region28
      $region27: #{_masked_sums.1} parent=15 // pred_region
        %s228 = smul.u32 %s17, 2
        %s229 = ssub.s32 1, %s228
        %s230 = smul.u32 %s229, %s18
        %s231 = smul.u32 2, %s230
        %p232 = scmp.lt.s32.totalorder %s231, 1
        %s233 = scalar_select %p232, %s231, 1
        %s234 = smul.addr %s233, 8
        %s235 = scalar_lea.vmem %s2, %s234
        %s236 = smul.u32 %s17, 2
        %s237 = ssub.s32 1, %s236
        %s238 = smul.u32 %s237, %s18
        %s239 = smul.u32 2, %s238
      $region28: #{_masked_sums.1} parent=15 // pred_fallthru
        _
      // Predicated region
      $region29: #{_masked_sums.1} parent=15 // pred_check
        %p240 = pneg %p144
      $region30: #{_masked_sums.1} parent=15 // pred_check_branch
        %242 = sbr.rel (%p240) target = $region32
      $region31: #{_masked_sums.1} parent=15 // pred_region
        %s243 = smul.u32 %s17, 2
        %s244 = ssub.s32 1, %s243
        %s245 = smul.u32 %s244, %s18
        %s246 = smul.u32 2, %s245
        %p247 = scmp.lt.s32.totalorder %s246, 1
        %s248 = scalar_select %p247, %s246, 1
        %s249 = smul.addr %s248, 2
        %s250 = scalar_lea.vmem %s3, %s249
        %s251 = smul.u32 %s17, 2
        %s252 = ssub.s32 1, %s251
        %s253 = smul.u32 %s252, %s18
        %s254 = smul.u32 2, %s253
      $region32: #{_masked_sums.1} parent=15 // pred_fallthru
        _
    $region16: #{_masked_sums.1} parent=5 // pred_fallthru
      _
    %p255 = scmp.le.s32.totalorder 1, %s10
    %p256 = scmp.lt.s32.totalorder %s10, 3
    %p257 = pnand %p255, %p256
    %p258 = pneg %p257
    // Predicated region
    $region33: #{_masked_sums.1} parent=5 // pred_check
      _
    $region34: #{_masked_sums.1} parent=5 // pred_check_branch
      %260 = sbr.rel (%p257) target = $region36
    $region35: #{_masked_sums.1} parent=5 // pred_region
      %s261 = ssub.s32 %s10, 1
      %s262 = smul.u32 %s19, 2
      %s263 = ssub.s32 1, %s262
      %s264 = smul.u32 %s263, %s20
      %s265 = smul.u32 2, %s264
      %p266 = scmp.lt.s32.totalorder %s265, 1
      %s267 = scalar_select %p266, %s265, 1
      %s268 = smul.addr %s267, 8
      %s269 = scalar_lea.vmem %s0, %s268
      %p270 = pneg %p54
      %p271 = pneg %p51
      %s272 = smul.u32 %s19, 2
      %s273 = ssub.s32 1, %s272
      %s274 = smul.u32 %s273, %s20
      %s275 = smul.u32 2, %s274
      %p276 = scmp.lt.s32.totalorder %s275, 1
      %s277 = scalar_select %p276, %s275, 1
      %s278 = smul.addr %s277, 8
      %s279 = scalar_lea.vmem %s1, %s278
      %p280 = pneg %p86
      %p281 = pneg %p83
      %s282 = smul.u32 %s19, 2
      %s283 = ssub.s32 1, %s282
      %s284 = smul.u32 %s283, %s20
      %s285 = smul.u32 2, %s284
      %p286 = scmp.lt.s32.totalorder %s285, 1
      %s287 = scalar_select %p286, %s285, 1
      %s288 = smul.addr %s287, 8
      %s289 = scalar_lea.vmem %s2, %s288
      %p290 = pneg %p118
      %p291 = pneg %p115
      %s292 = smul.u32 %s19, 2
      %s293 = ssub.s32 1, %s292
      %s294 = smul.u32 %s293, %s20
      %s295 = smul.u32 2, %s294
      %p296 = scmp.lt.s32.totalorder %s295, 1
      %s297 = scalar_select %p296, %s295, 1
      %s298 = smul.addr %s297, 2
      %s299 = scalar_lea.vmem %s3, %s298
      %p300 = pneg %p150
      %p301 = pneg %p147
      %p302 = pneg %p176
      %p303 = pneg %p173
      %p304 = scmp.lt.s32.totalorder %s19, 1
      %s305 = scalar_select %p304, %s19, 1
      %s306 = smul.addr %s305, 4
      %s307 = smul.addr %s306, 8
      %s308 = scalar_lea.vmem %s4, %s307
      %s309 = smul.u32 %s19, 2
      %s310 = ssub.s32 1, %s309
      %s311 = smul.u32 %s310, %s20
      %s312 = smul.u32 2, %s311
      %p313 = scmp.lt.s32.totalorder %s312, 1
      %s314 = scalar_select %p313, %s312, 1
      %s315 = smul.addr %s314, 8
      %s316 = scalar_lea.vmem %s0, %s315
      %s317 = smul.u32 %s19, 2
      %s318 = ssub.s32 1, %s317
      %s319 = smul.u32 %s318, %s20
      %s320 = smul.u32 2, %s319
      %s321 = smul.u32 %s19, 2
      %s322 = ssub.s32 1, %s321
      %s323 = smul.u32 %s322, %s20
      %s324 = smul.u32 2, %s323
      %p325 = scmp.lt.s32.totalorder %s324, 1
      %s326 = scalar_select %p325, %s324, 1
      %s327 = smul.addr %s326, 8
      %s328 = scalar_lea.vmem %s1, %s327
      %s329 = smul.u32 %s19, 2
      %s330 = ssub.s32 1, %s329
      %s331 = smul.u32 %s330, %s20
      %s332 = smul.u32 2, %s331
      %s333 = smul.u32 %s19, 2
      %s334 = ssub.s32 1, %s333
      %s335 = smul.u32 %s334, %s20
      %s336 = smul.u32 2, %s335
      %p337 = scmp.lt.s32.totalorder %s336, 1
      %s338 = scalar_select %p337, %s336, 1
      %s339 = smul.addr %s338, 8
      %s340 = scalar_lea.vmem %s2, %s339
      %s341 = smul.u32 %s19, 2
      %s342 = ssub.s32 1, %s341
      %s343 = smul.u32 %s342, %s20
      %s344 = smul.u32 2, %s343
      %s345 = smul.u32 %s19, 2
      %s346 = ssub.s32 1, %s345
      %s347 = smul.u32 %s346, %s20
      %s348 = smul.u32 2, %s347
      %p349 = scmp.lt.s32.totalorder %s348, 1
      %s350 = scalar_select %p349, %s348, 1
      %s351 = smul.addr %s350, 2
      %s352 = scalar_lea.vmem %s3, %s351
      %s353 = smul.u32 %s19, 2
      %s354 = ssub.s32 1, %s353
      %s355 = smul.u32 %s354, %s20
      %s356 = smul.u32 2, %s355
      %p357 = scmp.lt.s32.totalorder %s19, 1
      %s358 = scalar_select %p357, %s19, 1
      %s359 = smul.addr %s358, 4
      %s360 = smul.addr %s359, 8
      %s361 = scalar_lea.vmem %s4, %s360
      %p364 = scmp.eq.s32.totalorder %s20, 0
      // Predicated region
      $region37: #{_masked_sums.1} parent=35 // pred_check
        %p365 = pneg %p364
      $region38: #{_masked_sums.1} parent=35 // pred_check_branch
        %367 = sbr.rel (%p365) target = $region40
      $region39: #{_masked_sums.1} parent=35 // pred_region
        %368 = vst [vmem:[%s361] sm:$0xff] 0.0
        %369 = vst [vmem:[%s361 + $0x8] sm:$0xff] 0.0
        %370 = vst [vmem:[%s361 + $0x10] sm:$0xff] 0.0
        %371 = vst [vmem:[%s361 + $0x18] sm:$0xff] 0.0
      $region40: #{_masked_sums.1} parent=35 // pred_fallthru
        _
      %p372 = scmp.eq.s32.totalorder %s19, 0
      %p373 = scmp.lt.s32.totalorder %s20, 0
      %p374 = por %p372, %p373
      // Predicated region
      $region41: #{_masked_sums.1} parent=35 // pred_check
        %p375 = pneg %p374
      $region42: #{_masked_sums.1} parent=35 // pred_check_branch
        %377 = sbr.rel (%p375) target = $region44
      $region43: #{_masked_sums.1} parent=35 // pred_region
        %v378 = vld [vmem:[%s352] sm:$0x3]
        %v379 = vld [vmem:[%s352 + $0x2] sm:$0x3]
        %vm380 = vnez %v378
        %vm381 = vnez %v379
        %v382 = vld [vmem:[%s316] sm:$0xff]
        %v383 = vld [vmem:[%s316 + $0x8] sm:$0xff]
        %v384 = vsel %vm380, 16843009, 0
        %v385 = vsel %vm381, 16843009, 0
        %v386 = vunpack.c.0.s8 %v384
        %v387 = vunpack.c.0.s8 %v385
        %vm388 = vcmp.ne.s32.totalorder %v386, 0
        %vm389 = vcmp.ne.s32.totalorder %v387, 0
        %v390 = vsel %vm388, %v382, 0.0
        %v391 = vsel %vm389, %v383, 0.0
        %v392 = vld [vmem:[%s328] sm:$0xff]
        %v393 = vld [vmem:[%s328 + $0x8] sm:$0xff]
        %v394 = vsel %vm388, %v392, 0.0
        %v395 = vsel %vm389, %v393, 0.0
        %v396 = vld [vmem:[%s340] sm:$0xff]
        %v397 = vld [vmem:[%s340 + $0x8] sm:$0xff]
        %v398 = vsel %vm388, %v396, 0.0
        %v399 = vsel %vm389, %v397, 0.0
        %v400 = vsub.f32 %v394, %v390
        %v401 = vsub.f32 %v395, %v391
        %v402 = vsub.f32 %v398, %v390
        %v403 = vsub.f32 %v399, %v391
        %v404 = vmul.f32 %v400, %v400
        %v405 = vmul.f32 %v401, %v401
        %v406 = vand.u32 2147483647, %v400
        %v407 = vand.u32 2147483647, %v401
        %v408 = vand.u32 2147483647, %v402
        %v409 = vand.u32 2147483647, %v403
        %v410 = vadd.f32 %v408, 1e-18
        %v411 = vadd.f32 %v409, 1e-18
        %v412 = vrcp.pop %v410
        %v413 = vmul.f32 %v406, %v412
        %v414 = vrcp.pop %v411
        %v415 = vmul.f32 %v407, %v414
        %v416 = vmul.f32 %v404, %v413
        %v417 = vmul.f32 %v405, %v415
        %v418 = vsel %vm388, 1, 0
        %v419 = vsel %vm389, 1, 0
        %v420 = vcvt.s32.f32 %v418
        %v421 = vcvt.s32.f32 %v419
        %v422 = vld [vmem:[%s361] sm:$0xff]
        %v423 = vadd.f32 %v404, %v405
        %v424 = vadd.f32 %v422, %v423
        %425 = vst [vmem:[%s361] sm:$0xff] %v424
        %s426 = scalar_lea.vmem %s361, 8
        %v427 = vld [vmem:[%s426] sm:$0xff]
        %v428 = vadd.f32 %v413, %v415
        %v429 = vadd.f32 %v427, %v428
        %430 = vst [vmem:[%s426] sm:$0xff] %v429
        %s431 = scalar_lea.vmem %s361, 16
        %v432 = vld [vmem:[%s431] sm:$0xff]
        %v433 = vadd.f32 %v416, %v417
        %v434 = vadd.f32 %v432, %v433
        %435 = vst [vmem:[%s431] sm:$0xff] %v434
        %s436 = scalar_lea.vmem %s361, 24
        %v437 = vld [vmem:[%s436] sm:$0xff]
        %v438 = vadd.f32 %v420, %v421
        %v439 = vadd.f32 %v437, %v438
        %440 = vst [vmem:[%s436] sm:$0xff] %v439
      $region44: #{_masked_sums.1} parent=35 // pred_fallthru
        _
      %p441 = scmp.lt.s32.totalorder %s19, 1
      %s442 = scalar_select %p441, %s19, 1
      %s443 = smul.addr %s442, 4
      %s444 = smul.addr %s443, 8
      %s445 = scalar_lea.vmem %s4, %s444
      // Predicated region
      $region45: #{_masked_sums.1} parent=35 // pred_check
        %p446 = pneg %p173
      $region46: #{_masked_sums.1} parent=35 // pred_check_branch
        %448 = sbr.rel (%p446) target = $region48
      $region47: #{_masked_sums.1} parent=35 // pred_region
        _
      $region48: #{_masked_sums.1} parent=35 // pred_fallthru
        _
    $region36: #{_masked_sums.1} parent=5 // pred_fallthru
      _
    %p449 = scmp.le.s32.totalorder 2, %s10
    // Predicated region
    $region49: #{_masked_sums.1} parent=5 // pred_check
      %p450 = pneg %p449
    $region50: #{_masked_sums.1} parent=5 // pred_check_branch
      %452 = sbr.rel (%p450) target = $region52
    $region51: #{_masked_sums.1} parent=5 // pred_region
      %s453 = ssub.s32 %s10, 2
      // Predicated region
      $region53: #{_masked_sums.1} parent=51 // pred_check
        %p454 = pneg %p179
      $region54: #{_masked_sums.1} parent=51 // pred_check_branch
        %456 = sbr.rel (%p454) target = $region56
      $region55: #{_masked_sums.1} parent=51 // pred_region
        %p457 = scmp.lt.s32.totalorder %s21, 1
        %s458 = scalar_select %p457, %s21, 1
        %s459 = smul.addr %s458, 4
        %s460 = smul.addr %s459, 8
        %s461 = scalar_lea.vmem %s4, %s460
      $region56: #{_masked_sums.1} parent=51 // pred_fallthru
        _
    $region52: #{_masked_sums.1} parent=5 // pred_fallthru
      _
  $region6: #{_masked_sums.1} parent=0 // loop_footer
    %s14 = sadd.s32 1, %s10
  $region7: #{_masked_sums.1} parent=0 // loop_footer_branch
    %9 = sbr.rel target = $region3
  $region8: #{_masked_sums.1} parent=0 // loop_exit
    _

</llo_original>
